<compile_context>
chip_gen: v5e
topology: v5e:2x2
jax: 0.10.0
libtpu: 0.0.40
codegen_flags: <defaults>
</compile_context>

<pallas_src>
import functools

import jax
import jax.numpy as jnp
from jax.experimental import pallas as pl
from jax.experimental.pallas import tpu as pltpu


def _grad_loss_kernel(col_ref, x_ref, y_ref, o_ref, *, total_b, H, W):
    # col_ref: (1, HW) int32 column index (p % W), DMA'd once.
    # x_ref, y_ref: (tb, C, HW) input blocks. o_ref: (1, 1, 1) scalar partial.
    tb, C, HW = x_ref.shape
    g = pl.program_id(0)

    # Channel-summed difference; cast is fused per channel slab so no full
    # (tb, C, HW) f32 copy of x or y is ever live in VMEM.
    s = x_ref[:, 0, :].astype(jnp.float32) - y_ref[:, 0, :].astype(jnp.float32)
    for c in range(1, C):
        s = s + (x_ref[:, c, :].astype(jnp.float32)
                 - y_ref[:, c, :].astype(jnp.float32))

    # Ragged-tail mask (grid = cdiv(B, tb)): zero out-of-range batch rows
    # before any arithmetic, so garbage in the padded block cannot leak in.
    if total_b % tb:
        b_idx = g * tb + jax.lax.broadcasted_iota(jnp.int32, (tb, 1), 0)
        s = jnp.where(b_idx < total_b, s, 0.0)

    # Boundary masks on the flattened H*W axis (hoisted, tiny (1, HW) arrays).
    p = jax.lax.broadcasted_iota(jnp.int32, (1, HW), 1)      # flat position
    col = col_ref[...]                                       # p % W
    not_top = p >= W
    not_bot = p < (H - 1) * W
    not_left = col > 0
    not_right = col < (W - 1)

    # Separable zero-padded 3x3 box sum via XLU rolls on the flattened axis:
    #   roll(+W)  -> neighbor one row above,  roll(HW-W) -> one row below,
    #   roll(+1)  -> neighbor one col left,   roll(HW-1) -> one col right,
    # each with its wrapped edge masked back to zero.
    above = jnp.where(not_top, pltpu.roll(s, W, axis=1), 0.0)
    below = jnp.where(not_bot, pltpu.roll(s, HW - W, axis=1), 0.0)
    v = s + above + below
    left = jnp.where(not_left, pltpu.roll(v, 1, axis=1), 0.0)
    right = jnp.where(not_right, pltpu.roll(v, HW - 1, axis=1), 0.0)
    box = v + left + right

    # Laplacian = 8*center - (8 neighbors) = 9*center - 3x3 box sum.
    lap = 9.0 * s - box

    # Reduce all the way to one scalar per grid step; the cross-lane/sublane
    # reduce runs on the XLU and hides under the HBM-bound DMA.
    sq = lap * lap
    total = jnp.sum(sq, axis=1, keepdims=True)               # (tb, 1)
    total = jnp.sum(total, axis=0, keepdims=True)            # (1, 1)
    o_ref[...] = total.reshape(1, 1, 1)


def gradient_loss(x, y):
    """Pallas implementation of GradientLoss.forward(X, Y) (NCHW inputs)."""
    B, C, H, W = x.shape
    assert y.shape == x.shape
    HW = H * W

    # Contiguous reshape to a lane-dense layout (free in XLA for NCHW).
    xr = x.reshape(B, C, HW)
    yr = y.reshape(B, C, HW)
    col_ids = jnp.tile(jnp.arange(W, dtype=jnp.int32), H).reshape(1, HW)

    # Batch tiling sized from the *actual* input itemsize:
    #   2 inputs x 2 pipeline buffers x block  +  ~8 live f32 (tb, HW) temps
    # kept under ~32 MiB, with the scoped VMEM limit raised to 48 MiB (fits
    # v7x's 64 MiB physical and v5e/v6e's 128 MiB).
    # NOTE: if a single (C, H, W) slab itself exceeds the budget (very large
    # images), a channel-chunk grid axis with a VMEM accumulator would be the
    # next step; not needed for typical shapes.
    itemsize = jnp.dtype(x.dtype).itemsize
    per_b = 2 * (2 * C * HW * itemsize) + 8 * HW * 4
    budget = 32 * 1024 * 1024
    tb = max(1, min(B, budget // max(per_b, 1)))
    if B >= 2:
        tb = min(tb, (B + 1) // 2)     # >= 2 parallel steps (v7x megacore)
    G = pl.cdiv(B, tb)

    kernel = functools.partial(_grad_loss_kernel, total_b=B, H=H, W=W)

    partials = pl.pallas_call(
        kernel,
        out_shape=jax.ShapeDtypeStruct((G, 1, 1), jnp.float32),
        grid_spec=pltpu.PrefetchScalarGridSpec(
            num_scalar_prefetch=0,
            grid=(G,),
            in_specs=[
                pl.BlockSpec((1, HW), lambda g: (0, 0)),        # col ids
                pl.BlockSpec((tb, C, HW), lambda g: (g, 0, 0)),  # x
                pl.BlockSpec((tb, C, HW), lambda g: (g, 0, 0)),  # y
            ],
            out_specs=pl.BlockSpec((1, 1, 1), lambda g: (g, 0, 0)),
        ),
        # Each grid step owns its own output block -> batch axis is fully
        # independent and can be sharded across TensorCores (v7x megacore).
        compiler_params=pltpu.CompilerParams(
            dimension_semantics=("parallel",),
            vmem_limit_bytes=48 * 1024 * 1024,
        ),
    )(col_ids, xr, yr)

    # Fs = ||conv(X) - conv(Y)||_F^2 / (w * h * b * c)
    return jnp.sum(partials) / jnp.float32(B * C * H * W)


def _reference_loss(x, y):
    """Pure-JAX reference using an explicit conv (for validation only)."""
    B, C, H, W = x.shape
    lap = jnp.array([[-1., -1., -1.], [-1., 8., -1.], [-1., -1., -1.]],
                    jnp.float32)
    weight = jnp.broadcast_to(lap, (1, C, 3, 3))  # (O=1, I=C, 3, 3)
    conv = lambda a: jax.lax.conv_general_dilated(
        a.astype(jnp.float32), weight, window_strides=(1, 1),
        padding=((1, 1), (1, 1)),
        dimension_numbers=("NCHW", "OIHW", "NCHW"))
    d = conv(x) - conv(y)
    return jnp.sum(d * d) / jnp.float32(W * H * B * C)


if __name__ == "__main__":
    key = jax.random.PRNGKey(0)
    kx, ky = jax.random.split(key)
    B, C, H, W = 2, 4, 16, 16
    x = jax.random.normal(kx, (B, C, H, W), dtype=jnp.float32)
    y = jax.random.normal(ky, (B, C, H, W), dtype=jnp.float32)

    out = jax.jit(gradient_loss)(x, y)
    jax.block_until_ready(out)

    ref = _reference_loss(x, y)
    assert jnp.allclose(out, ref, rtol=1e-4, atol=1e-4), (out, ref)

    print("KERNEL_OK")
</pallas_src>

<mosaic_0001>
module attributes {stable_mosaic.version = 11 : i64} {
  func.func @_grad_loss_kernel(%arg0: i32, %arg1: memref<1x256xi32, #tpu.memory_space<vmem>>, %arg2: memref<1x4x256xf32, #tpu.memory_space<vmem>>, %arg3: memref<1x4x256xf32, #tpu.memory_space<vmem>>, %arg4: memref<1x1x1xf32, #tpu.memory_space<vmem>>) attributes {dimension_semantics = [#tpu.dimension_semantics<parallel>], iteration_bounds = array<i64: 2>, scalar_prefetch = 0 : i64, scratch_operands = 0 : i64, tpu.core_type = #tpu.core_type<tc>, window_params = [{pipeline_mode = #tpu.pipeline_mode<synchronous>, transform_indices = @transform_0, window_bounds = array<i64: 1, 256>}, {transform_indices = @transform_1, window_bounds = array<i64: 1, 4, 256>}, {transform_indices = @transform_2, window_bounds = array<i64: 1, 4, 256>}, {transform_indices = @transform_3, window_bounds = array<i64: 1, 1, 1>}]} {
    %c0 = arith.constant 0 : index
    %c0_0 = arith.constant 0 : index
    %c0_1 = arith.constant 0 : index
    %0 = vector.load %arg2[%c0, %c0_0, %c0_1] : memref<1x4x256xf32, #tpu.memory_space<vmem>>, vector<1x1x256xf32>
    %1 = vector.shape_cast %0 : vector<1x1x256xf32> to vector<1x256xf32>
    %c0_2 = arith.constant 0 : index
    %c0_3 = arith.constant 0 : index
    %c0_4 = arith.constant 0 : index
    %2 = vector.load %arg3[%c0_2, %c0_3, %c0_4] : memref<1x4x256xf32, #tpu.memory_space<vmem>>, vector<1x1x256xf32>
    %3 = vector.shape_cast %2 : vector<1x1x256xf32> to vector<1x256xf32>
    %4 = arith.subf %1, %3 : vector<1x256xf32>
    %c0_5 = arith.constant 0 : index
    %c1 = arith.constant 1 : index
    %c0_6 = arith.constant 0 : index
    %5 = vector.load %arg2[%c0_5, %c1, %c0_6] : memref<1x4x256xf32, #tpu.memory_space<vmem>>, vector<1x1x256xf32>
    %6 = vector.shape_cast %5 : vector<1x1x256xf32> to vector<1x256xf32>
    %c0_7 = arith.constant 0 : index
    %c1_8 = arith.constant 1 : index
    %c0_9 = arith.constant 0 : index
    %7 = vector.load %arg3[%c0_7, %c1_8, %c0_9] : memref<1x4x256xf32, #tpu.memory_space<vmem>>, vector<1x1x256xf32>
    %8 = vector.shape_cast %7 : vector<1x1x256xf32> to vector<1x256xf32>
    %9 = arith.subf %6, %8 : vector<1x256xf32>
    %10 = arith.addf %4, %9 : vector<1x256xf32>
    %c0_10 = arith.constant 0 : index
    %c2 = arith.constant 2 : index
    %c0_11 = arith.constant 0 : index
    %11 = vector.load %arg2[%c0_10, %c2, %c0_11] : memref<1x4x256xf32, #tpu.memory_space<vmem>>, vector<1x1x256xf32>
    %12 = vector.shape_cast %11 : vector<1x1x256xf32> to vector<1x256xf32>
    %c0_12 = arith.constant 0 : index
    %c2_13 = arith.constant 2 : index
    %c0_14 = arith.constant 0 : index
    %13 = vector.load %arg3[%c0_12, %c2_13, %c0_14] : memref<1x4x256xf32, #tpu.memory_space<vmem>>, vector<1x1x256xf32>
    %14 = vector.shape_cast %13 : vector<1x1x256xf32> to vector<1x256xf32>
    %15 = arith.subf %12, %14 : vector<1x256xf32>
    %16 = arith.addf %10, %15 : vector<1x256xf32>
    %c0_15 = arith.constant 0 : index
    %c3 = arith.constant 3 : index
    %c0_16 = arith.constant 0 : index
    %17 = vector.load %arg2[%c0_15, %c3, %c0_16] : memref<1x4x256xf32, #tpu.memory_space<vmem>>, vector<1x1x256xf32>
    %18 = vector.shape_cast %17 : vector<1x1x256xf32> to vector<1x256xf32>
    %c0_17 = arith.constant 0 : index
    %c3_18 = arith.constant 3 : index
    %c0_19 = arith.constant 0 : index
    %19 = vector.load %arg3[%c0_17, %c3_18, %c0_19] : memref<1x4x256xf32, #tpu.memory_space<vmem>>, vector<1x1x256xf32>
    %20 = vector.shape_cast %19 : vector<1x1x256xf32> to vector<1x256xf32>
    %21 = arith.subf %18, %20 : vector<1x256xf32>
    %22 = arith.addf %16, %21 : vector<1x256xf32>
    %23 = tpu.iota {dimensions = array<i32: 1>} : vector<1x256xi32>
    %c0_20 = arith.constant 0 : index
    %c0_21 = arith.constant 0 : index
    %24 = vector.load %arg1[%c0_20, %c0_21] : memref<1x256xi32, #tpu.memory_space<vmem>>, vector<1x256xi32>
    %c16_i32 = arith.constant 16 : i32
    %25 = vector.broadcast %c16_i32 : i32 to vector<1x256xi32>
    %26 = arith.cmpi sge, %23, %25 : vector<1x256xi32>
    %c240_i32 = arith.constant 240 : i32
    %27 = vector.broadcast %c240_i32 : i32 to vector<1x256xi32>
    %28 = arith.cmpi slt, %23, %27 : vector<1x256xi32>
    %c0_i32 = arith.constant 0 : i32
    %29 = vector.broadcast %c0_i32 : i32 to vector<1x256xi32>
    %30 = arith.cmpi sgt, %24, %29 : vector<1x256xi32>
    %c15_i32 = arith.constant 15 : i32
    %31 = vector.broadcast %c15_i32 : i32 to vector<1x256xi32>
    %32 = arith.cmpi slt, %24, %31 : vector<1x256xi32>
    %c16_i32_22 = arith.constant 16 : i32
    %33 = tpu.dynamic_rotate %22 by %c16_i32_22 dim 1 : vector<1x256xf32>, i32 -> vector<1x256xf32>
    %cst = arith.constant 0.000000e+00 : f32
    %34 = vector.broadcast %cst : f32 to vector<1x256xf32>
    %35 = arith.select %26, %33, %34 : vector<1x256xi1>, vector<1x256xf32>
    %c240_i32_23 = arith.constant 240 : i32
    %36 = tpu.dynamic_rotate %22 by %c240_i32_23 dim 1 : vector<1x256xf32>, i32 -> vector<1x256xf32>
    %cst_24 = arith.constant 0.000000e+00 : f32
    %37 = vector.broadcast %cst_24 : f32 to vector<1x256xf32>
    %38 = arith.select %28, %36, %37 : vector<1x256xi1>, vector<1x256xf32>
    %39 = arith.addf %22, %35 : vector<1x256xf32>
    %40 = arith.addf %39, %38 : vector<1x256xf32>
    %c1_i32 = arith.constant 1 : i32
    %41 = tpu.dynamic_rotate %40 by %c1_i32 dim 1 : vector<1x256xf32>, i32 -> vector<1x256xf32>
    %cst_25 = arith.constant 0.000000e+00 : f32
    %42 = vector.broadcast %cst_25 : f32 to vector<1x256xf32>
    %43 = arith.select %30, %41, %42 : vector<1x256xi1>, vector<1x256xf32>
    %c255_i32 = arith.constant 255 : i32
    %44 = tpu.dynamic_rotate %40 by %c255_i32 dim 1 : vector<1x256xf32>, i32 -> vector<1x256xf32>
    %cst_26 = arith.constant 0.000000e+00 : f32
    %45 = vector.broadcast %cst_26 : f32 to vector<1x256xf32>
    %46 = arith.select %32, %44, %45 : vector<1x256xi1>, vector<1x256xf32>
    %47 = arith.addf %40, %43 : vector<1x256xf32>
    %48 = arith.addf %47, %46 : vector<1x256xf32>
    %cst_27 = arith.constant 9.000000e+00 : f32
    %49 = vector.broadcast %cst_27 : f32 to vector<1x256xf32>
    %50 = arith.mulf %49, %22 : vector<1x256xf32>
    %51 = arith.subf %50, %48 : vector<1x256xf32>
    %52 = arith.mulf %51, %51 : vector<1x256xf32>
    %cst_28 = arith.constant dense<0.000000e+00> : vector<1xf32>
    %53 = vector.multi_reduction <add>, %52, %cst_28 [1] : vector<1x256xf32> to vector<1xf32>
    %54 = vector.shape_cast %53 : vector<1xf32> to vector<1x1xf32>
    %cst_29 = arith.constant dense<0.000000e+00> : vector<1xf32>
    %55 = vector.multi_reduction <add>, %54, %cst_29 [0] : vector<1x1xf32> to vector<1xf32>
    %56 = vector.shape_cast %55 : vector<1xf32> to vector<1x1xf32>
    %57 = vector.shape_cast %56 : vector<1x1xf32> to vector<1x1x1xf32>
    %c0_30 = arith.constant 0 : index
    %c0_31 = arith.constant 0 : index
    %c0_32 = arith.constant 0 : index
    %58 = vector.load %arg4[%c0_30, %c0_31, %c0_32] : memref<1x1x1xf32, #tpu.memory_space<vmem>>, vector<1x1x1xf32>
    tpu.vector_store %arg4[%c0_30, %c0_31, %c0_32], %57 {strides = array<i32>} : memref<1x1x1xf32, #tpu.memory_space<vmem>>, vector<1x1x1xf32>,
    return
  }
  func.func @transform_0(%arg0: i32) -> (i32, i32) {
    %c0_i32 = arith.constant 0 : i32
    %c0_i32_0 = arith.constant 0 : i32
    %c0_i32_1 = arith.constant 0 : i32
    return %c0_i32, %c0_i32_0 : i32, i32
  }
  func.func @transform_1(%arg0: i32) -> (i32, i32, i32) {
    %c0_i32 = arith.constant 0 : i32
    %c0_i32_0 = arith.constant 0 : i32
    %c0_i32_1 = arith.constant 0 : i32
    return %arg0, %c0_i32, %c0_i32_0 : i32, i32, i32
  }
  func.func @transform_2(%arg0: i32) -> (i32, i32, i32) {
    %c0_i32 = arith.constant 0 : i32
    %c0_i32_0 = arith.constant 0 : i32
    %c0_i32_1 = arith.constant 0 : i32
    return %arg0, %c0_i32, %c0_i32_0 : i32, i32, i32
  }
  func.func @transform_3(%arg0: i32) -> (i32, i32, i32) {
    %c0_i32 = arith.constant 0 : i32
    %c0_i32_0 = arith.constant 0 : i32
    %c0_i32_1 = arith.constant 0 : i32
    return %arg0, %c0_i32, %c0_i32_0 : i32, i32, i32
  }
}

</mosaic_0001>

<llo_original>
// kernel: tile.9
$region0: #{tile.9}
  %s0 = inlined_call_operand.vmem [shape: s32[16,16], index: 0, kind: input, shape index: {}]
  %s1 = inlined_call_operand.vmem [shape: s32[1,256], index: 1, kind: output, shape index: {}]
  $region1: #{tile.9} parent=0
    #allocation0 [shape = 'u8[8192]{0}', space=vmem, size = 0x2000, scoped, tag = 'scoped mem for output reshape']
    %s2 = smov 3
    %v3 = vld [vmem:[%s0] ss:$8 sm:%s2]
    %vm4 = vcmask 130048
    %5 = vst.msk [vmem:[#allocation0] ss:$8 sm:$0x3] %vm4, %v3
    %s6 = scalar_lea.vmem %s0, 7
    %s7 = smov 3
    %v8 = vld [vmem:[%s6] ss:$8 sm:%s7]
    %9 = vrot.lane.b32.xlu0 %v8, 112
    %v10 = vpop.permute.xlu0 %9
    %vm11 = vcmask 1048448
    %12 = vst.msk [vmem:[#allocation0] ss:$8 sm:$0x3] %vm11, %v10
    %s13 = scalar_lea.vmem %s0, 6
    %s14 = smov 3
    %v15 = vld [vmem:[%s13] ss:$8 sm:%s14]
    %16 = vrot.lane.b32.xlu0 %v15, 96
    %v17 = vpop.permute.xlu0 %16
    %vm18 = vcmask 917248
    %19 = vst.msk [vmem:[#allocation0] ss:$8 sm:$0x3] %vm18, %v17
    %s20 = scalar_lea.vmem %s0, 5
    %s21 = smov 3
    %v22 = vld [vmem:[%s20] ss:$8 sm:%s21]
    %23 = vrot.lane.b32.xlu0 %v22, 80
    %v24 = vpop.permute.xlu0 %23
    %vm25 = vcmask 786048
    %26 = vst.msk [vmem:[#allocation0] ss:$8 sm:$0x3] %vm25, %v24
    %s27 = scalar_lea.vmem %s0, 4
    %s28 = smov 3
    %v29 = vld [vmem:[%s27] ss:$8 sm:%s28]
    %30 = vrot.lane.b32.xlu0 %v29, 64
    %v31 = vpop.permute.xlu0 %30
    %vm32 = vcmask 654848
    %33 = vst.msk [vmem:[#allocation0] ss:$8 sm:$0x3] %vm32, %v31
    %s34 = scalar_lea.vmem %s0, 3
    %s35 = smov 3
    %v36 = vld [vmem:[%s34] ss:$8 sm:%s35]
    %37 = vrot.lane.b32.xlu0 %v36, 48
    %v38 = vpop.permute.xlu0 %37
    %vm39 = vcmask 523648
    %40 = vst.msk [vmem:[#allocation0] ss:$8 sm:$0x3] %vm39, %v38
    %s41 = scalar_lea.vmem %s0, 2
    %s42 = smov 3
    %v43 = vld [vmem:[%s41] ss:$8 sm:%s42]
    %44 = vrot.lane.b32.xlu0 %v43, 32
    %v45 = vpop.permute.xlu0 %44
    %vm46 = vcmask 392448
    %47 = vst.msk [vmem:[#allocation0] ss:$8 sm:$0x3] %vm46, %v45
    %s48 = scalar_lea.vmem %s0, 1
    %s49 = smov 3
    %v50 = vld [vmem:[%s48] ss:$8 sm:%s49]
    %51 = vrot.lane.b32.xlu0 %v50, 16
    %v52 = vpop.permute.xlu0 %51
    %vm53 = vcmask 261248
    %54 = vst.msk [vmem:[#allocation0] ss:$8 sm:$0x3] %vm53, %v52
    %s56 = ssub.s32 2, 1
    %v57 = vld [vmem:[#allocation0] sm:%s56]
    %s59 = ssub.s32 2, 1
    %60 = vst [vmem:[%s1] sm:%s59] %v57
    %s61 = scalar_lea.vmem [#allocation0], 8
    %v62 = vld [vmem:[%s61] sm:%s56]
    %s64 = ssub.s32 2, 1
    %s65 = scalar_lea.vmem %s1, 1
    %66 = vst [vmem:[%s65] sm:%s64] %v62

// kernel: gradient_loss.1
$region0: #{gradient_loss.1}
  #allocation0 [shape = 'u32[]', space=smem, size = 0x4, offset = 0x4, fixed_abs, tag = 'smem constant byte address 0x4 - core index']
  #allocation1 [shape = 'u32[72,128]{1,0:T(1,128)}', space=vmem, size = 0x9000, scoped, tag = 'internal scratch']
  %s0 = inlined_call_operand.vmem [shape: s32[1,256], index: 0, kind: input, shape index: {}]
  %s1 = inlined_call_operand.vmem [shape: f32[2,4,256], index: 1, kind: input, shape index: {}]
  %s2 = inlined_call_operand.vmem [shape: f32[2,4,256], index: 2, kind: input, shape index: {}]
  %s3 = inlined_call_operand.vmem [shape: f32[2,1,1], index: 3, kind: output, shape index: {}]
  %s4 = sld [smem:[#allocation0]]
  $region45: #{gradient_loss.1} parent=0
    _
  %s6 = ssub.s32 1, %s4
  %s7 = scalar_select 0, %s6, %s4
  loop: start=0, step=1, limit=4
  $region2: #{gradient_loss.1} parent=0 // loop_pre_header
    _
  $region3: #{gradient_loss.1} parent=0 // loop_header
    %s9 = sphi 0, %s13
    %p10 = scmp.ge.s32.totalorder %s9, 4
    %s17 = sphi 0, %s17
    %s19 = sphi 0, %s17
    %s20 = sphi 0, %s19
    %s34 = sphi 0, %s20
    %s40 = sphi 0, %s42
    %s43 = sphi 0, %s40
    %s44 = sphi 0, %s43
    %s60 = sphi 0, %s44
    %s66 = sphi 0, %s68
    %s69 = sphi 0, %s66
    %s70 = sphi 0, %s69
    %s86 = sphi 0, %s70
    %s92 = sphi 0, %s94
    %s95 = sphi 0, %s92
    %s96 = sphi 0, %s95
    %s112 = sphi 0, %s96
  $region4: #{gradient_loss.1} parent=0 // loop_header_branch
    %12 = sbr.rel (%p10) target = $region8
  $region5: #{gradient_loss.1} parent=0 // loop_body
    %s14 = ssub.s32 %s9, 1
    %s15 = ssub.s32 %s9, 2
    %s16 = sadd.s32 %s9, 1
    %s18 = sadd.s32 %s17, 1
    %p21 = scmp.eq.s32.totalorder %s9, 1
    %p22 = scmp.ne.s32.totalorder %s17, %s19
    %p23 = scmp.eq.s32.totalorder %s9, 0
    %p24 = por %p22, %p23
    %p25 = scmp.ne.s32.totalorder %s17, %s19
    %p26 = scmp.eq.s32.totalorder %s14, 1
    %p27 = por %p25, %p26
    %p28 = scmp.ne.s32.totalorder %s19, %s20
    %p29 = scmp.eq.s32.totalorder %s14, 0
    %p30 = por %p28, %p29
    %p31 = scmp.ne.s32.totalorder %s19, %s20
    %p32 = scmp.eq.s32.totalorder %s15, 1
    %p33 = por %p31, %p32
    %p35 = scmp.ne.s32.totalorder %s20, %s34
    %p36 = scmp.eq.s32.totalorder %s15, 0
    %p37 = por %p35, %p36
    %s38 = ssub.s32 %s9, %s16
    %p39 = scmp.eq.s32.totalorder %s38, 0
    %s41 = sadd.s32 %s40, 1
    %s42 = scalar_select %p39, %s40, %s41
    %p45 = pneg %p39
    %p46 = scmp.eq.s32.totalorder %s9, 1
    %p47 = por %p45, %p46
    %p48 = scmp.ne.s32.totalorder %s40, %s43
    %p49 = scmp.eq.s32.totalorder %s9, 0
    %p50 = por %p48, %p49
    %p51 = scmp.ne.s32.totalorder %s40, %s43
    %p52 = scmp.eq.s32.totalorder %s14, 1
    %p53 = por %p51, %p52
    %p54 = scmp.ne.s32.totalorder %s43, %s44
    %p55 = scmp.eq.s32.totalorder %s14, 0
    %p56 = por %p54, %p55
    %p57 = scmp.ne.s32.totalorder %s43, %s44
    %p58 = scmp.eq.s32.totalorder %s15, 1
    %p59 = por %p57, %p58
    %p61 = scmp.ne.s32.totalorder %s44, %s60
    %p62 = scmp.eq.s32.totalorder %s15, 0
    %p63 = por %p61, %p62
    %s64 = ssub.s32 %s9, %s16
    %p65 = scmp.eq.s32.totalorder %s64, 0
    %s67 = sadd.s32 %s66, 1
    %s68 = scalar_select %p65, %s66, %s67
    %p71 = pneg %p65
    %p72 = scmp.eq.s32.totalorder %s9, 1
    %p73 = por %p71, %p72
    %p74 = scmp.ne.s32.totalorder %s66, %s69
    %p75 = scmp.eq.s32.totalorder %s9, 0
    %p76 = por %p74, %p75
    %p77 = scmp.ne.s32.totalorder %s66, %s69
    %p78 = scmp.eq.s32.totalorder %s14, 1
    %p79 = por %p77, %p78
    %p80 = scmp.ne.s32.totalorder %s69, %s70
    %p81 = scmp.eq.s32.totalorder %s14, 0
    %p82 = por %p80, %p81
    %p83 = scmp.ne.s32.totalorder %s69, %s70
    %p84 = scmp.eq.s32.totalorder %s15, 1
    %p85 = por %p83, %p84
    %p87 = scmp.ne.s32.totalorder %s70, %s86
    %p88 = scmp.eq.s32.totalorder %s15, 0
    %p89 = por %p87, %p88
    %s90 = ssub.s32 %s9, %s16
    %p91 = scmp.eq.s32.totalorder %s90, 0
    %s93 = sadd.s32 %s92, 1
    %s94 = scalar_select %p91, %s92, %s93
    %p97 = pneg %p91
    %p98 = scmp.eq.s32.totalorder %s9, 1
    %p99 = por %p97, %p98
    %p100 = scmp.ne.s32.totalorder %s92, %s95
    %p101 = scmp.eq.s32.totalorder %s9, 0
    %p102 = por %p100, %p101
    %p103 = scmp.ne.s32.totalorder %s92, %s95
    %p104 = scmp.eq.s32.totalorder %s14, 1
    %p105 = por %p103, %p104
    %p106 = scmp.ne.s32.totalorder %s95, %s96
    %p107 = scmp.eq.s32.totalorder %s14, 0
    %p108 = por %p106, %p107
    %p109 = scmp.ne.s32.totalorder %s95, %s96
    %p110 = scmp.eq.s32.totalorder %s15, 1
    %p111 = por %p109, %p110
    %p113 = scmp.ne.s32.totalorder %s96, %s112
    %p114 = scmp.eq.s32.totalorder %s15, 0
    %p115 = por %p113, %p114
    %p116 = scmp.le.s32.totalorder 1, %s9
    %p117 = scmp.lt.s32.totalorder %s9, 3
    %p118 = pnand %p116, %p117
    %p119 = pneg %p118
    // Predicated region
    $region9: #{gradient_loss.1} parent=5 // pred_check
      _
    $region10: #{gradient_loss.1} parent=5 // pred_check_branch
      %121 = sbr.rel (%p118) target = $region12
    $region11: #{gradient_loss.1} parent=5 // pred_region
      %s122 = ssub.s32 %s9, 1
      // Predicated region
      $region13: #{gradient_loss.1} parent=11 // pred_check
        %p123 = pneg %p30
      $region14: #{gradient_loss.1} parent=11 // pred_check_branch
        %125 = sbr.rel (%p123) target = $region16
      $region15: #{gradient_loss.1} parent=11 // pred_region
        _
      $region16: #{gradient_loss.1} parent=11 // pred_fallthru
        _
    $region12: #{gradient_loss.1} parent=5 // pred_fallthru
      _
    %p126 = scmp.lt.s32.totalorder %s9, 2
    // Predicated region
    $region17: #{gradient_loss.1} parent=5 // pred_check
      %p127 = pneg %p126
    $region18: #{gradient_loss.1} parent=5 // pred_check_branch
      %129 = sbr.rel (%p127) target = $region20
    $region19: #{gradient_loss.1} parent=5 // pred_region
      // Predicated region
      $region21: #{gradient_loss.1} parent=19 // pred_check
        %p130 = pneg %p50
      $region22: #{gradient_loss.1} parent=19 // pred_check_branch
        %132 = sbr.rel (%p130) target = $region24
      $region23: #{gradient_loss.1} parent=19 // pred_region
        %p133 = scmp.lt.s32.totalorder %s9, 1
        %s134 = scalar_select %p133, %s9, 1
        %s135 = smul.addr %s134, 2
        %s136 = smul.addr %s135, 4
        %s137 = scalar_lea.vmem %s1, %s136
      $region24: #{gradient_loss.1} parent=19 // pred_fallthru
        _
      // Predicated region
      $region25: #{gradient_loss.1} parent=19 // pred_check
        %p138 = pneg %p76
      $region26: #{gradient_loss.1} parent=19 // pred_check_branch
        %140 = sbr.rel (%p138) target = $region28
      $region27: #{gradient_loss.1} parent=19 // pred_region
        %p141 = scmp.lt.s32.totalorder %s9, 1
        %s142 = scalar_select %p141, %s9, 1
        %s143 = smul.addr %s142, 2
        %s144 = smul.addr %s143, 4
        %s145 = scalar_lea.vmem %s2, %s144
      $region28: #{gradient_loss.1} parent=19 // pred_fallthru
        _
    $region20: #{gradient_loss.1} parent=5 // pred_fallthru
      _
    %p146 = scmp.le.s32.totalorder 1, %s9
    %p147 = scmp.lt.s32.totalorder %s9, 3
    %p148 = pnand %p146, %p147
    %p149 = pneg %p148
    // Predicated region
    $region29: #{gradient_loss.1} parent=5 // pred_check
      _
    $region30: #{gradient_loss.1} parent=5 // pred_check_branch
      %151 = sbr.rel (%p148) target = $region32
    $region31: #{gradient_loss.1} parent=5 // pred_region
      %s152 = ssub.s32 %s9, 1
      %p153 = pneg %p30
      %p154 = pneg %p27
      %p155 = scmp.lt.s32.totalorder %s14, 1
      %s156 = scalar_select %p155, %s14, 1
      %s157 = smul.addr %s156, 2
      %s158 = smul.addr %s157, 4
      %s159 = scalar_lea.vmem %s1, %s158
      %p160 = pneg %p56
      %p161 = pneg %p53
      %p162 = scmp.lt.s32.totalorder %s14, 1
      %s163 = scalar_select %p162, %s14, 1
      %s164 = smul.addr %s163, 2
      %s165 = smul.addr %s164, 4
      %s166 = scalar_lea.vmem %s2, %s165
      %p167 = pneg %p82
      %p168 = pneg %p79
      %p169 = pneg %p108
      %p170 = pneg %p105
      %p171 = scmp.lt.s32.totalorder %s14, 1
      %s172 = scalar_select %p171, %s14, 1
      %s173 = scalar_lea.vmem %s3, %s172
      %p174 = scmp.lt.s32.totalorder %s14, 1
      %s175 = scalar_select %p174, %s14, 1
      %s176 = smul.addr %s175, 2
      %s177 = smul.addr %s176, 4
      %s178 = scalar_lea.vmem %s1, %s177
      %p179 = scmp.lt.s32.totalorder %s14, 1
      %s180 = scalar_select %p179, %s14, 1
      %s181 = smul.addr %s180, 2
      %s182 = smul.addr %s181, 4
      %s183 = scalar_lea.vmem %s2, %s182
      %p184 = scmp.lt.s32.totalorder %s14, 1
      %s185 = scalar_select %p184, %s14, 1
      %s186 = scalar_lea.vmem %s3, %s185
      %v187 = vld [vmem:[%s178] ss:$4 sm:$0x3]
      %v188 = vld [vmem:[%s183] ss:$4 sm:$0x3]
      %v189 = vsub.f32 %v187, %v188
      %s190 = scalar_lea.vmem %s178, 1
      %v191 = vld [vmem:[%s190] ss:$4 sm:$0x3]
      %s192 = scalar_lea.vmem %s183, 1
      %v193 = vld [vmem:[%s192] ss:$4 sm:$0x3]
      %v194 = vsub.f32 %v191, %v193
      %v195 = vadd.f32 %v189, %v194
      %s196 = scalar_lea.vmem %s178, 2
      %v197 = vld [vmem:[%s196] ss:$4 sm:$0x3]
      %s198 = scalar_lea.vmem %s183, 2
      %v199 = vld [vmem:[%s198] ss:$4 sm:$0x3]
      %v200 = vsub.f32 %v197, %v199
      %v201 = vadd.f32 %v195, %v200
      %s202 = scalar_lea.vmem %s178, 3
      %v203 = vld [vmem:[%s202] ss:$4 sm:$0x3]
      %s204 = scalar_lea.vmem %s183, 3
      %v205 = vld [vmem:[%s204] ss:$4 sm:$0x3]
      %v206 = vsub.f32 %v203, %v205
      %v207 = vadd.f32 %v201, %v206
      %v208 = vlaneseq
      %v209 = vand.u32 %v208, 127
      %v210 = vadd.s32 %v209, 128
      %v211 = vld [vmem:[%s0] sm:$0x3]
      %vm212 = vcmp.ge.s32.totalorder %v209, 16
      %vm213 = vcmp.ge.s32.totalorder %v210, 16
      %vm214 = vcmp.lt.s32.totalorder %v209, 240
      %vm215 = vcmp.lt.s32.totalorder %v210, 240
      %vm216 = vcmp.gt.s32.totalorder %v211, 0
      %vm217 = vcmp.lt.s32.totalorder %v211, 15
      %v219 = vperm.slane %v207, 0
      %v220 = vperm.slane %v207, 1
      %223 = vrot.lane.b32.xlu0 %v219, 16
      %v224 = vpop.permute.xlu0 %223
      %225 = vrot.lane.b32.xlu0 %v220, 16
      %v226 = vpop.permute.xlu0 %225
      %vm227 = vcmp.lt.s32.totalorder %v209, 16
      %v228 = vsel %vm227, %v224, %v226
      %v229 = vsel %vm227, %v226, %v224
      %v230 = vsel %vm212, %v229, 0.0
      %v231 = vsel %vm213, %v228, 0.0
      %232 = vrot.lane.b32.xlu0 %v219, 112
      %v233 = vpop.permute.xlu0 %232
      %234 = vrot.lane.b32.xlu0 %v220, 112
      %v235 = vpop.permute.xlu0 %234
      %vm236 = vcmp.lt.s32.totalorder %v209, 112
      %v237 = vsel %vm236, %v233, %v235
      %v238 = vsel %vm236, %v235, %v233
      %v239 = vsel %vm214, %v237, 0.0
      %v240 = vsel %vm215, %v238, 0.0
      %v243 = vrot.slane %v231, 7
      %vm244 = vcmask 1040384
      %v245 = vsel %vm244, %v230, %v243
      %v247 = vadd.f32 %v207, %v245
      %v250 = vrot.slane %v240, 7
      %v251 = vsel %vm244, %v239, %v250
      %v253 = vadd.f32 %v247, %v251
      %v255 = vperm.slane %v253, 0
      %v256 = vperm.slane %v253, 1
      %259 = vrot.lane.b32.xlu0 %v255, 1
      %v260 = vpop.permute.xlu0 %259
      %261 = vrot.lane.b32.xlu0 %v256, 1
      %v262 = vpop.permute.xlu0 %261
      %vm263 = vcmp.lt.s32.totalorder %v209, 1
      %v264 = vsel %vm263, %v260, %v262
      %v265 = vsel %vm263, %v262, %v260
      %v268 = vrot.slane %v264, 7
      %v269 = vsel %vm244, %v265, %v268
      %v271 = vsel %vm216, %v269, 0.0
      %272 = vrot.lane.b32.xlu0 %v255, 127
      %v273 = vpop.permute.xlu0 %272
      %274 = vrot.lane.b32.xlu0 %v256, 127
      %v275 = vpop.permute.xlu0 %274
      %vm276 = vcmp.lt.s32.totalorder %v209, 127
      %v277 = vsel %vm276, %v273, %v275
      %v278 = vsel %vm276, %v275, %v273
      %v281 = vrot.slane %v278, 7
      %v282 = vsel %vm244, %v277, %v281
      %v284 = vsel %vm217, %v282, 0.0
      %v285 = vadd.f32 %v253, %v271
      %v286 = vadd.f32 %v285, %v284
      %v287 = vmul.f32 %v207, 9.0
      %v288 = vsub.f32 %v287, %v286
      %v289 = vmul.f32 %v288, %v288
      %v291 = vperm.slane %v289, 0
      %v292 = vperm.slane %v289, 1
      %v295 = vsel %vm244, %v291, 0.0
      %v296 = vsel %vm244, %v292, 0.0
      %v297 = vadd.f32 %v295, %v296
      %298 = vadd.xlane.f32.xlu0 %v297
      %v299 = vpop.xlane.xlu0 %298
      %v300 = vadd.f32 %v299, 0.0
      %vm301 = vcmask 0
      %302 = vst.msk [vmem:[%s186] sm:$0x1] %vm301, %v300
      %p303 = scmp.lt.s32.totalorder %s14, 1
      %s304 = scalar_select %p303, %s14, 1
      %s305 = scalar_lea.vmem %s3, %s304
      // Predicated region
      $region33: #{gradient_loss.1} parent=31 // pred_check
        %p306 = pneg %p105
      $region34: #{gradient_loss.1} parent=31 // pred_check_branch
        %308 = sbr.rel (%p306) target = $region36
      $region35: #{gradient_loss.1} parent=31 // pred_region
        _
      $region36: #{gradient_loss.1} parent=31 // pred_fallthru
        _
    $region32: #{gradient_loss.1} parent=5 // pred_fallthru
      _
    %p309 = scmp.le.s32.totalorder 2, %s9
    // Predicated region
    $region37: #{gradient_loss.1} parent=5 // pred_check
      %p310 = pneg %p309
    $region38: #{gradient_loss.1} parent=5 // pred_check_branch
      %312 = sbr.rel (%p310) target = $region40
    $region39: #{gradient_loss.1} parent=5 // pred_region
      %s313 = ssub.s32 %s9, 2
      // Predicated region
      $region41: #{gradient_loss.1} parent=39 // pred_check
        %p314 = pneg %p111
      $region42: #{gradient_loss.1} parent=39 // pred_check_branch
        %316 = sbr.rel (%p314) target = $region44
      $region43: #{gradient_loss.1} parent=39 // pred_region
        %p317 = scmp.lt.s32.totalorder %s15, 1
        %s318 = scalar_select %p317, %s15, 1
        %s319 = scalar_lea.vmem %s3, %s318
      $region44: #{gradient_loss.1} parent=39 // pred_fallthru
        _
    $region40: #{gradient_loss.1} parent=5 // pred_fallthru
      _
  $region6: #{gradient_loss.1} parent=0 // loop_footer
    %s13 = sadd.s32 1, %s9
  $region7: #{gradient_loss.1} parent=0 // loop_footer_branch
    %8 = sbr.rel target = $region3
  $region8: #{gradient_loss.1} parent=0 // loop_exit
    _

</llo_original>
